<compile_context>
chip_gen: v7x
topology: tpu7x:2x2x1
jax: 0.10.0
libtpu: 0.0.40
codegen_flags: <defaults>
</compile_context>

<pallas_src>
import functools

import jax
import jax.numpy as jnp
from jax.experimental import pallas as pl
from jax.experimental.pallas import tpu as pltpu


def positional_encoding(seq_len, h_dim):
    """Replicates PositionalEmbedding.__init__ exactly (including its use of
    arange(seq_len) -- not arange(h_dim) -- for the frequency exponent)."""
    seq = jnp.arange(seq_len, dtype=jnp.float32).reshape(-1, 1)               # (S, 1)
    freq = 2.0 * jnp.floor(jnp.arange(seq_len, dtype=jnp.float32) * 0.5) / h_dim
    freq = jnp.power(10000.0, freq).reshape(-1, 1)                            # (S, 1)
    pe = jnp.broadcast_to(seq / freq, (seq_len, h_dim))                       # (S, D)
    col = jnp.arange(h_dim)
    return jnp.where(col % 2 == 0, jnp.sin(pe), jnp.cos(pe)).astype(jnp.float32)


def _pick_rows_per_tile(n_rows, seq_len):
    """Largest lane-dense tile (multiple of 8, <=1024) that divides n_rows, aligns
    with the positional-encoding period, and (if possible) yields >=2 grid steps
    so both v7x TensorCores get work."""
    best = None
    for t in (1024, 512, 256, 128, 64, 32, 16, 8):
        if t > n_rows or n_rows % t or t % 8:
            continue
        if not (t % seq_len == 0 or seq_len % t == 0):
            continue
        if best is None:
            best = t
        if n_rows // t >= 2:
            return t
    if best is None:
        raise ValueError(
            f"cannot tile B*S={n_rows} rows (need a multiple-of-8 divisor aligned "
            f"with seq_len={seq_len})")
    return best


def _embed_kernel(tok_smem, table_ref, pe_ref, gamma_ref, beta_ref, o_ref,
                  emb_ref, *, rows_per_tile, vocab, eps):
    # tok_smem: (B*S,) int32 in SMEM (scalar prefetch)
    # table_ref: (V, D) VMEM (grid-invariant), pe_ref: (T, D) or modular (T, D) view
    # gamma/beta: (1, D), o_ref/emb_ref: (T, D)
    tile = pl.program_id(0)
    base = tile * rows_per_tile

    def gather_row(i, carry):
        tok = tok_smem[base + i]                          # scalar read (SMEM)
        # Clamp like jnp gather (PyTorch would raise); avoids OOB VMEM reads.
        tok = jnp.minimum(jnp.maximum(tok, 0), vocab - 1)
        emb_ref[pl.ds(i, 1), :] = table_ref[pl.ds(tok, 1), :]
        return carry

    jax.lax.fori_loop(0, rows_per_tile, gather_row, 0,
                      unroll=min(rows_per_tile, 8))

    # Positional encoding add + LayerNorm over the feature (lane) dim, vectorized
    # over the whole (T, D) tile.
    x = emb_ref[...] + pe_ref[...]
    mean = jnp.mean(x, axis=-1, keepdims=True)
    diff = x - mean
    var = jnp.mean(diff * diff, axis=-1, keepdims=True)
    inv = jax.lax.rsqrt(var + eps)                        # EUP slot
    y = diff * inv * gamma_ref[...] + beta_ref[...]

    # Dropout(p=0.1): identity in eval mode.
    o_ref[...] = y.astype(o_ref.dtype)


def embedding_forward(tokens, table, pe, gamma, beta, *, eps=1e-12):
    """tokens: (B, S) int32; table: (V, D); pe: (>=S, D); gamma/beta: (1, D)."""
    B, S = tokens.shape
    V, D = table.shape
    assert S % 2 == 0, "module asserts seq_len is even"
    pe = pe[:S]                                   # PositionalEmbedding.forward slice

    N = B * S
    T = _pick_rows_per_tile(N, S)
    num_tiles = N // T

    tok_flat = tokens.reshape(N).astype(jnp.int32)

    # Positional encoding block: tiles either contain whole sequences (T % S == 0,
    # pe pre-tiled to T rows, invariant block) or evenly split a sequence
    # (S % T == 0, modular block index along pe rows).
    if T % S == 0:
        pe_in = pe if T == S else jnp.tile(pe, (T // S, 1))          # (T, D)
        pe_index = lambda t, tok: (0, 0)
    else:
        pe_in = pe                                                    # (S, D)
        blocks_per_seq = S // T
        pe_index = lambda t, tok: (t % blocks_per_seq, 0)

    kernel = functools.partial(_embed_kernel, rows_per_tile=T, vocab=V, eps=eps)

    out_flat = pl.pallas_call(
        kernel,
        out_shape=jax.ShapeDtypeStruct((N, D), table.dtype),
        grid_spec=pltpu.PrefetchScalarGridSpec(
            num_scalar_prefetch=1,                 # tokens -> SMEM
            grid=(num_tiles,),
            in_specs=[
                pl.BlockSpec((V, D), lambda t, tok: (0, 0)),   # table (grid-invariant)
                pl.BlockSpec((T, D), pe_index),                # positional encoding
                pl.BlockSpec((1, D), lambda t, tok: (0, 0)),   # gamma
                pl.BlockSpec((1, D), lambda t, tok: (0, 0)),   # beta
            ],
            out_specs=pl.BlockSpec((T, D), lambda t, tok: (t, 0)),
            scratch_shapes=[pltpu.VMEM((T, D), jnp.float32)],  # gathered rows
        ),
        compiler_params=pltpu.CompilerParams(
            dimension_semantics=("parallel",)),
    )(tok_flat, table, pe_in, gamma, beta)

    return out_flat.reshape(B, S, D)


def _reference(tokens, table, pe, gamma, beta, eps=1e-12):
    embed = table[tokens]                               # (B, S, D) gather
    x = embed + pe[None, :tokens.shape[1]]
    mean = x.mean(-1, keepdims=True)
    var = ((x - mean) ** 2).mean(-1, keepdims=True)
    return (x - mean) * jax.lax.rsqrt(var + eps) * gamma[0] + beta[0]


if __name__ == "__main__":
    B, S, D = 2, 8, 128          # batch, seq_len (even), h_dim (lane-dense)
    VOCAB, PAD = 64, 0

    key = jax.random.PRNGKey(0)
    k_tok, k_tab, k_g, k_b = jax.random.split(key, 4)

    tokens = jax.random.randint(k_tok, (B, S), 0, VOCAB, dtype=jnp.int32)
    tokens = tokens.at[:, -2:].set(PAD)                 # exercise padding_idx rows

    table = jax.random.normal(k_tab, (VOCAB, D), dtype=jnp.float32)
    table = table.at[PAD].set(0.0)                      # nn.Embedding(padding_idx=...) zero row

    gamma = 1.0 + 0.1 * jax.random.normal(k_g, (1, D), dtype=jnp.float32)
    beta = 0.1 * jax.random.normal(k_b, (1, D), dtype=jnp.float32)

    pe = positional_encoding(S, D)

    out = jax.block_until_ready(embedding_forward(tokens, table, pe, gamma, beta))
    ref = _reference(tokens, table, pe, gamma, beta)

    assert out.shape == (B, S, D)
    assert jnp.allclose(out, ref, atol=1e-4, rtol=1e-4), "mismatch vs reference"

    print("KERNEL_OK")
</pallas_src>

<mosaic_0001>
module attributes {stable_mosaic.version = 11 : i64} {
  func.func @_embed_kernel(%arg0: i32, %arg1: memref<16xi32, #tpu.memory_space<smem>>, %arg2: memref<64x128xf32, #tpu.memory_space<vmem>>, %arg3: memref<8x128xf32, #tpu.memory_space<vmem>>, %arg4: memref<1x128xf32, #tpu.memory_space<vmem>>, %arg5: memref<1x128xf32, #tpu.memory_space<vmem>>, %arg6: memref<8x128xf32, #tpu.memory_space<vmem>>, %arg7: memref<8x128xf32, #tpu.memory_space<vmem>>) attributes {dimension_semantics = [#tpu.dimension_semantics<parallel>], iteration_bounds = array<i64: 2>, scalar_prefetch = 1 : i64, scratch_operands = 1 : i64, tpu.core_type = #tpu.core_type<tc>, window_params = [{pipeline_mode = #tpu.pipeline_mode<synchronous>, transform_indices = @transform_0, window_bounds = array<i64: 64, 128>}, {pipeline_mode = #tpu.pipeline_mode<synchronous>, transform_indices = @transform_1, window_bounds = array<i64: 8, 128>}, {pipeline_mode = #tpu.pipeline_mode<synchronous>, transform_indices = @transform_2, window_bounds = array<i64: 1, 128>}, {pipeline_mode = #tpu.pipeline_mode<synchronous>, transform_indices = @transform_3, window_bounds = array<i64: 1, 128>}, {transform_indices = @transform_4, window_bounds = array<i64: 8, 128>}]} {
    %c8_i32 = arith.constant 8 : i32
    %0 = arith.muli %arg0, %c8_i32 : i32
    %c0_i32 = arith.constant 0 : i32
    %1 = arith.addi %0, %c0_i32 : i32
    %2 = arith.index_cast %1 : i32 to index
    %3 = memref.load %arg1[%2] : memref<16xi32, #tpu.memory_space<smem>>
    %c0_i32_0 = arith.constant 0 : i32
    %4 = arith.maxsi %3, %c0_i32_0 : i32
    %c63_i32 = arith.constant 63 : i32
    %5 = arith.minsi %4, %c63_i32 : i32
    %6 = arith.index_cast %5 : i32 to index
    %c0 = arith.constant 0 : index
    %7 = vector.load %arg2[%6, %c0] : memref<64x128xf32, #tpu.memory_space<vmem>>, vector<1x128xf32>
    %8 = arith.index_cast %c0_i32 : i32 to index
    %c0_1 = arith.constant 0 : index
    %9 = vector.load %arg7[%8, %c0_1] : memref<8x128xf32, #tpu.memory_space<vmem>>, vector<1x128xf32>
    tpu.vector_store %arg7[%8, %c0_1], %7 {strides = array<i32>} : memref<8x128xf32, #tpu.memory_space<vmem>>, vector<1x128xf32>,
    %c1_i32 = arith.constant 1 : i32
    %10 = arith.addi %0, %c1_i32 : i32
    %11 = arith.index_cast %10 : i32 to index
    %12 = memref.load %arg1[%11] : memref<16xi32, #tpu.memory_space<smem>>
    %c0_i32_2 = arith.constant 0 : i32
    %13 = arith.maxsi %12, %c0_i32_2 : i32
    %c63_i32_3 = arith.constant 63 : i32
    %14 = arith.minsi %13, %c63_i32_3 : i32
    %15 = arith.index_cast %14 : i32 to index
    %c0_4 = arith.constant 0 : index
    %16 = vector.load %arg2[%15, %c0_4] : memref<64x128xf32, #tpu.memory_space<vmem>>, vector<1x128xf32>
    %17 = arith.index_cast %c1_i32 : i32 to index
    %c0_5 = arith.constant 0 : index
    %18 = vector.load %arg7[%17, %c0_5] : memref<8x128xf32, #tpu.memory_space<vmem>>, vector<1x128xf32>
    tpu.vector_store %arg7[%17, %c0_5], %16 {strides = array<i32>} : memref<8x128xf32, #tpu.memory_space<vmem>>, vector<1x128xf32>,
    %c2_i32 = arith.constant 2 : i32
    %19 = arith.addi %0, %c2_i32 : i32
    %20 = arith.index_cast %19 : i32 to index
    %21 = memref.load %arg1[%20] : memref<16xi32, #tpu.memory_space<smem>>
    %c0_i32_6 = arith.constant 0 : i32
    %22 = arith.maxsi %21, %c0_i32_6 : i32
    %c63_i32_7 = arith.constant 63 : i32
    %23 = arith.minsi %22, %c63_i32_7 : i32
    %24 = arith.index_cast %23 : i32 to index
    %c0_8 = arith.constant 0 : index
    %25 = vector.load %arg2[%24, %c0_8] : memref<64x128xf32, #tpu.memory_space<vmem>>, vector<1x128xf32>
    %26 = arith.index_cast %c2_i32 : i32 to index
    %c0_9 = arith.constant 0 : index
    %27 = vector.load %arg7[%26, %c0_9] : memref<8x128xf32, #tpu.memory_space<vmem>>, vector<1x128xf32>
    tpu.vector_store %arg7[%26, %c0_9], %25 {strides = array<i32>} : memref<8x128xf32, #tpu.memory_space<vmem>>, vector<1x128xf32>,
    %c3_i32 = arith.constant 3 : i32
    %28 = arith.addi %0, %c3_i32 : i32
    %29 = arith.index_cast %28 : i32 to index
    %30 = memref.load %arg1[%29] : memref<16xi32, #tpu.memory_space<smem>>
    %c0_i32_10 = arith.constant 0 : i32
    %31 = arith.maxsi %30, %c0_i32_10 : i32
    %c63_i32_11 = arith.constant 63 : i32
    %32 = arith.minsi %31, %c63_i32_11 : i32
    %33 = arith.index_cast %32 : i32 to index
    %c0_12 = arith.constant 0 : index
    %34 = vector.load %arg2[%33, %c0_12] : memref<64x128xf32, #tpu.memory_space<vmem>>, vector<1x128xf32>
    %35 = arith.index_cast %c3_i32 : i32 to index
    %c0_13 = arith.constant 0 : index
    %36 = vector.load %arg7[%35, %c0_13] : memref<8x128xf32, #tpu.memory_space<vmem>>, vector<1x128xf32>
    tpu.vector_store %arg7[%35, %c0_13], %34 {strides = array<i32>} : memref<8x128xf32, #tpu.memory_space<vmem>>, vector<1x128xf32>,
    %c4_i32 = arith.constant 4 : i32
    %37 = arith.addi %0, %c4_i32 : i32
    %38 = arith.index_cast %37 : i32 to index
    %39 = memref.load %arg1[%38] : memref<16xi32, #tpu.memory_space<smem>>
    %c0_i32_14 = arith.constant 0 : i32
    %40 = arith.maxsi %39, %c0_i32_14 : i32
    %c63_i32_15 = arith.constant 63 : i32
    %41 = arith.minsi %40, %c63_i32_15 : i32
    %42 = arith.index_cast %41 : i32 to index
    %c0_16 = arith.constant 0 : index
    %43 = vector.load %arg2[%42, %c0_16] : memref<64x128xf32, #tpu.memory_space<vmem>>, vector<1x128xf32>
    %44 = arith.index_cast %c4_i32 : i32 to index
    %c0_17 = arith.constant 0 : index
    %45 = vector.load %arg7[%44, %c0_17] : memref<8x128xf32, #tpu.memory_space<vmem>>, vector<1x128xf32>
    tpu.vector_store %arg7[%44, %c0_17], %43 {strides = array<i32>} : memref<8x128xf32, #tpu.memory_space<vmem>>, vector<1x128xf32>,
    %c5_i32 = arith.constant 5 : i32
    %46 = arith.addi %0, %c5_i32 : i32
    %47 = arith.index_cast %46 : i32 to index
    %48 = memref.load %arg1[%47] : memref<16xi32, #tpu.memory_space<smem>>
    %c0_i32_18 = arith.constant 0 : i32
    %49 = arith.maxsi %48, %c0_i32_18 : i32
    %c63_i32_19 = arith.constant 63 : i32
    %50 = arith.minsi %49, %c63_i32_19 : i32
    %51 = arith.index_cast %50 : i32 to index
    %c0_20 = arith.constant 0 : index
    %52 = vector.load %arg2[%51, %c0_20] : memref<64x128xf32, #tpu.memory_space<vmem>>, vector<1x128xf32>
    %53 = arith.index_cast %c5_i32 : i32 to index
    %c0_21 = arith.constant 0 : index
    %54 = vector.load %arg7[%53, %c0_21] : memref<8x128xf32, #tpu.memory_space<vmem>>, vector<1x128xf32>
    tpu.vector_store %arg7[%53, %c0_21], %52 {strides = array<i32>} : memref<8x128xf32, #tpu.memory_space<vmem>>, vector<1x128xf32>,
    %c6_i32 = arith.constant 6 : i32
    %55 = arith.addi %0, %c6_i32 : i32
    %56 = arith.index_cast %55 : i32 to index
    %57 = memref.load %arg1[%56] : memref<16xi32, #tpu.memory_space<smem>>
    %c0_i32_22 = arith.constant 0 : i32
    %58 = arith.maxsi %57, %c0_i32_22 : i32
    %c63_i32_23 = arith.constant 63 : i32
    %59 = arith.minsi %58, %c63_i32_23 : i32
    %60 = arith.index_cast %59 : i32 to index
    %c0_24 = arith.constant 0 : index
    %61 = vector.load %arg2[%60, %c0_24] : memref<64x128xf32, #tpu.memory_space<vmem>>, vector<1x128xf32>
    %62 = arith.index_cast %c6_i32 : i32 to index
    %c0_25 = arith.constant 0 : index
    %63 = vector.load %arg7[%62, %c0_25] : memref<8x128xf32, #tpu.memory_space<vmem>>, vector<1x128xf32>
    tpu.vector_store %arg7[%62, %c0_25], %61 {strides = array<i32>} : memref<8x128xf32, #tpu.memory_space<vmem>>, vector<1x128xf32>,
    %c7_i32 = arith.constant 7 : i32
    %64 = arith.addi %0, %c7_i32 : i32
    %65 = arith.index_cast %64 : i32 to index
    %66 = memref.load %arg1[%65] : memref<16xi32, #tpu.memory_space<smem>>
    %c0_i32_26 = arith.constant 0 : i32
    %67 = arith.maxsi %66, %c0_i32_26 : i32
    %c63_i32_27 = arith.constant 63 : i32
    %68 = arith.minsi %67, %c63_i32_27 : i32
    %69 = arith.index_cast %68 : i32 to index
    %c0_28 = arith.constant 0 : index
    %70 = vector.load %arg2[%69, %c0_28] : memref<64x128xf32, #tpu.memory_space<vmem>>, vector<1x128xf32>
    %71 = arith.index_cast %c7_i32 : i32 to index
    %c0_29 = arith.constant 0 : index
    %72 = vector.load %arg7[%71, %c0_29] : memref<8x128xf32, #tpu.memory_space<vmem>>, vector<1x128xf32>
    tpu.vector_store %arg7[%71, %c0_29], %70 {strides = array<i32>} : memref<8x128xf32, #tpu.memory_space<vmem>>, vector<1x128xf32>,
    %c8_i32_30 = arith.constant 8 : i32
    %c0_31 = arith.constant 0 : index
    %c0_32 = arith.constant 0 : index
    %73 = vector.load %arg7[%c0_31, %c0_32] : memref<8x128xf32, #tpu.memory_space<vmem>>, vector<8x128xf32>
    %c0_33 = arith.constant 0 : index
    %c0_34 = arith.constant 0 : index
    %74 = vector.load %arg3[%c0_33, %c0_34] : memref<8x128xf32, #tpu.memory_space<vmem>>, vector<8x128xf32>
    %75 = arith.addf %73, %74 : vector<8x128xf32>
    %cst = arith.constant dense<0.000000e+00> : vector<8xf32>
    %76 = vector.multi_reduction <add>, %75, %cst [1] : vector<8x128xf32> to vector<8xf32>
    %77 = vector.shape_cast %76 : vector<8xf32> to vector<8x1xf32>
    %cst_35 = arith.constant 1.280000e+02 : f32
    %78 = vector.broadcast %cst_35 : f32 to vector<8x1xf32>
    %79 = arith.divf %77, %78 : vector<8x1xf32>
    %80 = vector.broadcast %79 : vector<8x1xf32> to vector<8x128xf32>
    %81 = arith.subf %75, %80 : vector<8x128xf32>
    %82 = arith.mulf %81, %81 : vector<8x128xf32>
    %cst_36 = arith.constant dense<0.000000e+00> : vector<8xf32>
    %83 = vector.multi_reduction <add>, %82, %cst_36 [1] : vector<8x128xf32> to vector<8xf32>
    %84 = vector.shape_cast %83 : vector<8xf32> to vector<8x1xf32>
    %cst_37 = arith.constant 1.280000e+02 : f32
    %85 = vector.broadcast %cst_37 : f32 to vector<8x1xf32>
    %86 = arith.divf %84, %85 : vector<8x1xf32>
    %cst_38 = arith.constant 9.99999996E-13 : f32
    %87 = vector.broadcast %cst_38 : f32 to vector<8x1xf32>
    %88 = arith.addf %86, %87 : vector<8x1xf32>
    %89 = math.rsqrt %88 : vector<8x1xf32>
    %90 = vector.broadcast %89 : vector<8x1xf32> to vector<8x128xf32>
    %91 = arith.mulf %81, %90 : vector<8x128xf32>
    %c0_39 = arith.constant 0 : index
    %c0_40 = arith.constant 0 : index
    %92 = vector.load %arg4[%c0_39, %c0_40] : memref<1x128xf32, #tpu.memory_space<vmem>>, vector<1x128xf32>
    %93 = vector.broadcast %92 : vector<1x128xf32> to vector<8x128xf32>
    %94 = arith.mulf %91, %93 : vector<8x128xf32>
    %c0_41 = arith.constant 0 : index
    %c0_42 = arith.constant 0 : index
    %95 = vector.load %arg5[%c0_41, %c0_42] : memref<1x128xf32, #tpu.memory_space<vmem>>, vector<1x128xf32>
    %96 = vector.broadcast %95 : vector<1x128xf32> to vector<8x128xf32>
    %97 = arith.addf %94, %96 : vector<8x128xf32>
    %c0_43 = arith.constant 0 : index
    %c0_44 = arith.constant 0 : index
    %98 = vector.load %arg6[%c0_43, %c0_44] : memref<8x128xf32, #tpu.memory_space<vmem>>, vector<8x128xf32>
    tpu.vector_store %arg6[%c0_43, %c0_44], %97 {strides = array<i32>} : memref<8x128xf32, #tpu.memory_space<vmem>>, vector<8x128xf32>,
    return
  }
  func.func @transform_0(%arg0: i32, %arg1: memref<16xi32, #tpu.memory_space<smem>>) -> (i32, i32) {
    %c0_i32 = arith.constant 0 : i32
    %c0_i32_0 = arith.constant 0 : i32
    %c0_i32_1 = arith.constant 0 : i32
    return %c0_i32, %c0_i32_0 : i32, i32
  }
  func.func @transform_1(%arg0: i32, %arg1: memref<16xi32, #tpu.memory_space<smem>>) -> (i32, i32) {
    %c0_i32 = arith.constant 0 : i32
    %c0_i32_0 = arith.constant 0 : i32
    %c0_i32_1 = arith.constant 0 : i32
    return %c0_i32, %c0_i32_0 : i32, i32
  }
  func.func @transform_2(%arg0: i32, %arg1: memref<16xi32, #tpu.memory_space<smem>>) -> (i32, i32) {
    %c0_i32 = arith.constant 0 : i32
    %c0_i32_0 = arith.constant 0 : i32
    %c0_i32_1 = arith.constant 0 : i32
    return %c0_i32, %c0_i32_0 : i32, i32
  }
  func.func @transform_3(%arg0: i32, %arg1: memref<16xi32, #tpu.memory_space<smem>>) -> (i32, i32) {
    %c0_i32 = arith.constant 0 : i32
    %c0_i32_0 = arith.constant 0 : i32
    %c0_i32_1 = arith.constant 0 : i32
    return %c0_i32, %c0_i32_0 : i32, i32
  }
  func.func @transform_4(%arg0: i32, %arg1: memref<16xi32, #tpu.memory_space<smem>>) -> (i32, i32) {
    %c0_i32 = arith.constant 0 : i32
    %c0_i32_0 = arith.constant 0 : i32
    return %arg0, %c0_i32 : i32, i32
  }
}

</mosaic_0001>

<llo_original>
// kernel: tpu_custom_call.1
$region0: #{tpu_custom_call.1}
  #allocation0 [shape = 'u32[]', space=smem, size = 0x4, offset = 0x4, fixed_abs, tag = 'smem constant byte address 0x4 - core index']
  #allocation1 [shape = 'u32[144,128]{1,0:T(1,128)}', space=vmem, size = 0x12000, scoped, tag = 'internal scratch']
  #allocation2 [shape = 'f32[8,128]{1,0:T(8,128)}', space=vmem, size = 0x1000, scoped, tag = 'scratch operand']
  #allocation3 [shape = 's32[1]{0}', space=sflag, size = 0x4, scoped, tag = 'scoped memory for tpu_custom_call.1']
  #allocation4 [shape = 'u8[512]{0}', space=smem, size = 0x200, scoped, tag = 'prefetched SMEM operand 0']
  %s0 = inlined_call_operand.hbm [shape: s32[16], index: 0, kind: input, shape index: {}]
  %s1 = inlined_call_operand.hbm [shape: f32[64,128], index: 1, kind: input, shape index: {}]
  %s2 = inlined_call_operand.hbm [shape: f32[8,128], index: 2, kind: input, shape index: {}]
  %s3 = inlined_call_operand.vmem [shape: f32[1,128], index: 3, kind: input, shape index: {}]
  %s4 = inlined_call_operand.vmem [shape: f32[1,128], index: 4, kind: input, shape index: {}]
  %s5 = inlined_call_operand.hbm [shape: f32[16,128], index: 5, kind: output, shape index: {}]
  %s6 = sld [smem:[#allocation0]]
  $region57: #{tpu_custom_call.1} parent=0
    _
  %s8 = ssub.s32 1, %s6
  %s9 = scalar_select 0, %s8, %s6
  %11 = dma.hbm_to_smem %s0, 16, [#allocation4], [#allocation3]
  %12 = dma.done [#allocation3], 16
  %13 = sfence
  $region1: #{tpu_custom_call.1} parent=0
    #allocation5 [shape = 'u8[32768]{0}', space=vmem, size = 0x8000, scoped, tag = 'input window, operand 1, single buffered']
    #allocation6 [shape = 's32[2]{0}', space=sflag, size = 0x8, scoped, tag = 'scoped memory for tpu_custom_call.1']
    #allocation7 [shape = 's32[2]{0}', space=sflag, size = 0x8, scoped, tag = 'scoped memory for tpu_custom_call.1']
    #allocation8 [shape = 'u8[4096]{0}', space=vmem, size = 0x1000, scoped, tag = 'input window, operand 2, single buffered']
    #allocation9 [shape = 's32[1]{0}', space=sflag, size = 0x4, scoped, tag = 'scoped memory for tpu_custom_call.1']
    #allocation10 [shape = 'u8[8192]{0}', space=vmem, size = 0x2000, scoped, tag = 'output window, operand 0']
    %14 = vsyncpa [#allocation6], 0
    %15 = vsyncpa [#allocation9], 0
    %16 = vsyncpa [#allocation7], 0
    %s17 = scalar_lea.sflag [#allocation7], 1
    %18 = vsyncpa %s17, 0
    loop: start=0, step=1, limit=4
    $region2: #{tpu_custom_call.1} parent=1 // loop_pre_header
      _
    $region3: #{tpu_custom_call.1} parent=1 // loop_header
      %s20 = sphi 0, %s24
      %p21 = scmp.ge.s32.totalorder %s20, 4
      %s28 = sphi 0, %s28
      %s30 = sphi 0, %s28
      %s31 = sphi 0, %s30
      %s45 = sphi 0, %s31
      %s49 = sphi 0, %s49
      %s51 = sphi 0, %s49
      %s52 = sphi 0, %s51
      %s66 = sphi 0, %s52
      %s70 = sphi 0, %s70
      %s72 = sphi 0, %s70
      %s73 = sphi 0, %s72
      %s87 = sphi 0, %s73
      %s91 = sphi 0, %s91
      %s93 = sphi 0, %s91
      %s94 = sphi 0, %s93
      %s108 = sphi 0, %s94
      %s114 = sphi 0, %s116
      %s117 = sphi 0, %s114
      %s118 = sphi 0, %s117
      %s134 = sphi 0, %s118
    $region4: #{tpu_custom_call.1} parent=1 // loop_header_branch
      %23 = sbr.rel (%p21) target = $region8
    $region5: #{tpu_custom_call.1} parent=1 // loop_body
      %s25 = ssub.s32 %s20, 1
      %s26 = ssub.s32 %s20, 2
      %s27 = sadd.s32 %s20, 1
      %s29 = sadd.s32 %s28, 1
      %p32 = scmp.eq.s32.totalorder %s20, 1
      %p33 = scmp.ne.s32.totalorder %s28, %s30
      %p34 = scmp.eq.s32.totalorder %s20, 0
      %p35 = por %p33, %p34
      %p36 = scmp.ne.s32.totalorder %s28, %s30
      %p37 = scmp.eq.s32.totalorder %s25, 1
      %p38 = por %p36, %p37
      %p39 = scmp.ne.s32.totalorder %s30, %s31
      %p40 = scmp.eq.s32.totalorder %s25, 0
      %p41 = por %p39, %p40
      %p42 = scmp.ne.s32.totalorder %s30, %s31
      %p43 = scmp.eq.s32.totalorder %s26, 1
      %p44 = por %p42, %p43
      %p46 = scmp.ne.s32.totalorder %s31, %s45
      %p47 = scmp.eq.s32.totalorder %s26, 0
      %p48 = por %p46, %p47
      %s50 = sadd.s32 %s49, 1
      %p53 = scmp.eq.s32.totalorder %s20, 1
      %p54 = scmp.ne.s32.totalorder %s49, %s51
      %p55 = scmp.eq.s32.totalorder %s20, 0
      %p56 = por %p54, %p55
      %p57 = scmp.ne.s32.totalorder %s49, %s51
      %p58 = scmp.eq.s32.totalorder %s25, 1
      %p59 = por %p57, %p58
      %p60 = scmp.ne.s32.totalorder %s51, %s52
      %p61 = scmp.eq.s32.totalorder %s25, 0
      %p62 = por %p60, %p61
      %p63 = scmp.ne.s32.totalorder %s51, %s52
      %p64 = scmp.eq.s32.totalorder %s26, 1
      %p65 = por %p63, %p64
      %p67 = scmp.ne.s32.totalorder %s52, %s66
      %p68 = scmp.eq.s32.totalorder %s26, 0
      %p69 = por %p67, %p68
      %s71 = sadd.s32 %s70, 1
      %p74 = scmp.eq.s32.totalorder %s20, 1
      %p75 = scmp.ne.s32.totalorder %s70, %s72
      %p76 = scmp.eq.s32.totalorder %s20, 0
      %p77 = por %p75, %p76
      %p78 = scmp.ne.s32.totalorder %s70, %s72
      %p79 = scmp.eq.s32.totalorder %s25, 1
      %p80 = por %p78, %p79
      %p81 = scmp.ne.s32.totalorder %s72, %s73
      %p82 = scmp.eq.s32.totalorder %s25, 0
      %p83 = por %p81, %p82
      %p84 = scmp.ne.s32.totalorder %s72, %s73
      %p85 = scmp.eq.s32.totalorder %s26, 1
      %p86 = por %p84, %p85
      %p88 = scmp.ne.s32.totalorder %s73, %s87
      %p89 = scmp.eq.s32.totalorder %s26, 0
      %p90 = por %p88, %p89
      %s92 = sadd.s32 %s91, 1
      %p95 = scmp.eq.s32.totalorder %s20, 1
      %p96 = scmp.ne.s32.totalorder %s91, %s93
      %p97 = scmp.eq.s32.totalorder %s20, 0
      %p98 = por %p96, %p97
      %p99 = scmp.ne.s32.totalorder %s91, %s93
      %p100 = scmp.eq.s32.totalorder %s25, 1
      %p101 = por %p99, %p100
      %p102 = scmp.ne.s32.totalorder %s93, %s94
      %p103 = scmp.eq.s32.totalorder %s25, 0
      %p104 = por %p102, %p103
      %p105 = scmp.ne.s32.totalorder %s93, %s94
      %p106 = scmp.eq.s32.totalorder %s26, 1
      %p107 = por %p105, %p106
      %p109 = scmp.ne.s32.totalorder %s94, %s108
      %p110 = scmp.eq.s32.totalorder %s26, 0
      %p111 = por %p109, %p110
      %s112 = ssub.s32 %s20, %s27
      %p113 = scmp.eq.s32.totalorder %s112, 0
      %s115 = sadd.s32 %s114, 1
      %s116 = scalar_select %p113, %s114, %s115
      %p119 = pneg %p113
      %p120 = scmp.eq.s32.totalorder %s20, 1
      %p121 = por %p119, %p120
      %p122 = scmp.ne.s32.totalorder %s114, %s117
      %p123 = scmp.eq.s32.totalorder %s20, 0
      %p124 = por %p122, %p123
      %p125 = scmp.ne.s32.totalorder %s114, %s117
      %p126 = scmp.eq.s32.totalorder %s25, 1
      %p127 = por %p125, %p126
      %p128 = scmp.ne.s32.totalorder %s117, %s118
      %p129 = scmp.eq.s32.totalorder %s25, 0
      %p130 = por %p128, %p129
      %p131 = scmp.ne.s32.totalorder %s117, %s118
      %p132 = scmp.eq.s32.totalorder %s26, 1
      %p133 = por %p131, %p132
      %p135 = scmp.ne.s32.totalorder %s118, %s134
      %p136 = scmp.eq.s32.totalorder %s26, 0
      %p137 = por %p135, %p136
      %p138 = scmp.le.s32.totalorder 1, %s20
      %p139 = scmp.lt.s32.totalorder %s20, 3
      %p140 = pnand %p138, %p139
      %p141 = pneg %p140
      // Predicated region
      $region9: #{tpu_custom_call.1} parent=5 // pred_check
        _
      $region10: #{tpu_custom_call.1} parent=5 // pred_check_branch
        %143 = sbr.rel (%p140) target = $region12
      $region11: #{tpu_custom_call.1} parent=5 // pred_region
        %s144 = ssub.s32 %s20, 1
        // Predicated region
        $region13: #{tpu_custom_call.1} parent=11 // pred_check
          %p145 = pneg %p41
        $region14: #{tpu_custom_call.1} parent=11 // pred_check_branch
          %147 = sbr.rel (%p145) target = $region16
        $region15: #{tpu_custom_call.1} parent=11 // pred_region
          %s149 = ssub.s32 1024, 1024
          %150 = vsyncadd [#allocation6], %s149
          %s151 = sshll.u32 [#allocation5], 4
          %s152 = int_to_ptr.vmem [resolvable:$true] %s151
          %157 = dma.hbm_to_vmem [thread:$0]  %s1, 1024, %s152, [#allocation6], 128, 128, 8
        $region16: #{tpu_custom_call.1} parent=11 // pred_fallthru
          _
        // Predicated region
        $region17: #{tpu_custom_call.1} parent=11 // pred_check
          %p158 = pneg %p62
        $region18: #{tpu_custom_call.1} parent=11 // pred_check_branch
          %160 = sbr.rel (%p158) target = $region20
        $region19: #{tpu_custom_call.1} parent=11 // pred_region
          %s162 = ssub.s32 128, 128
          %163 = vsyncadd [#allocation9], %s162
          %s165 = sshll.u32 [#allocation8], 4
          %s166 = int_to_ptr.vmem [resolvable:$true] %s165
          %168 = dma.hbm_to_vmem [thread:$0]  %s2, 128, %s166, [#allocation9]
        $region20: #{tpu_custom_call.1} parent=11 // pred_fallthru
          _
        // Predicated region
        $region21: #{tpu_custom_call.1} parent=11 // pred_check
          %p169 = pneg %p83
        $region22: #{tpu_custom_call.1} parent=11 // pred_check_branch
          %171 = sbr.rel (%p169) target = $region24
        $region23: #{tpu_custom_call.1} parent=11 // pred_region
          _
        $region24: #{tpu_custom_call.1} parent=11 // pred_fallthru
          _
        // Predicated region
        $region25: #{tpu_custom_call.1} parent=11 // pred_check
          %p172 = pneg %p104
        $region26: #{tpu_custom_call.1} parent=11 // pred_check_branch
          %174 = sbr.rel (%p172) target = $region28
        $region27: #{tpu_custom_call.1} parent=11 // pred_region
          _
        $region28: #{tpu_custom_call.1} parent=11 // pred_fallthru
          _
      $region12: #{tpu_custom_call.1} parent=5 // pred_fallthru
        _
      %p175 = scmp.lt.s32.totalorder %s20, 2
      // Predicated region
      $region29: #{tpu_custom_call.1} parent=5 // pred_check
        %p176 = pneg %p175
      $region30: #{tpu_custom_call.1} parent=5 // pred_check_branch
        %178 = sbr.rel (%p176) target = $region32
      $region31: #{tpu_custom_call.1} parent=5 // pred_region
        _
      $region32: #{tpu_custom_call.1} parent=5 // pred_fallthru
        _
      %p179 = scmp.le.s32.totalorder 1, %s20
      %p180 = scmp.lt.s32.totalorder %s20, 3
      %p181 = pnand %p179, %p180
      %p182 = pneg %p181
      // Predicated region
      $region33: #{tpu_custom_call.1} parent=5 // pred_check
        _
      $region34: #{tpu_custom_call.1} parent=5 // pred_check_branch
        %184 = sbr.rel (%p181) target = $region36
      $region35: #{tpu_custom_call.1} parent=5 // pred_region
        %s185 = ssub.s32 %s20, 1
        // Predicated region
        $region37: #{tpu_custom_call.1} parent=35 // pred_check
          %p186 = pneg %p41
        $region38: #{tpu_custom_call.1} parent=35 // pred_check_branch
          %188 = sbr.rel (%p186) target = $region40
        $region39: #{tpu_custom_call.1} parent=35 // pred_region
          %189 = dma.done [#allocation6], 1024
        $region40: #{tpu_custom_call.1} parent=35 // pred_fallthru
          _
        // Predicated region
        $region41: #{tpu_custom_call.1} parent=35 // pred_check
          %p190 = pneg %p62
        $region42: #{tpu_custom_call.1} parent=35 // pred_check_branch
          %192 = sbr.rel (%p190) target = $region44
        $region43: #{tpu_custom_call.1} parent=35 // pred_region
          %193 = dma.done [#allocation9], 128
        $region44: #{tpu_custom_call.1} parent=35 // pred_fallthru
          _
        %p194 = pneg %p41
        %p195 = pneg %p38
        %p196 = pneg %p62
        %p197 = pneg %p59
        %p198 = pneg %p83
        %p199 = pneg %p80
        %p200 = pneg %p104
        %p201 = pneg %p101
        %p202 = pneg %p130
        %p203 = pneg %p127
        %s204 = sand.u32 %s117, 1
        %s205 = scalar_lea.sflag [#allocation7], %s204
        %s206 = sand.u32 %s117, 1
        %s207 = smul.addr %s206, 8
        %s208 = scalar_lea.vmem [#allocation10], %s207
        %s209 = smul.u32 %s25, 8
        %s210 = sld [smem:[#allocation4 + %s209]]
        %p211 = scmp.gt.s32.totalorder %s210, 0
        %s212 = scalar_select %p211, %s210, 0
        %p213 = scmp.lt.s32.totalorder %s212, 63
        %s214 = scalar_select %p213, %s212, 63
        %s215 = scalar_lea.vmem [#allocation5], %s214
        %v216 = vld [vmem:[%s215] sm:$0x1]
        %217 = vst [vmem:[#allocation2] sm:$0x1] %v216
        %s218 = sadd.s32 %s209, 1
        %s219 = sld [smem:[#allocation4 + %s218]]
        %p220 = scmp.gt.s32.totalorder %s219, 0
        %s221 = scalar_select %p220, %s219, 0
        %p222 = scmp.lt.s32.totalorder %s221, 63
        %s223 = scalar_select %p222, %s221, 63
        %s224 = scalar_lea.vmem [#allocation5], %s223
        %v225 = vld [vmem:[%s224] sm:$0x1]
        %226 = vst [vmem:[#allocation2 + $0x1] sm:$0x1] %v225
        %s227 = sadd.s32 %s209, 2
        %s228 = sld [smem:[#allocation4 + %s227]]
        %p229 = scmp.gt.s32.totalorder %s228, 0
        %s230 = scalar_select %p229, %s228, 0
        %p231 = scmp.lt.s32.totalorder %s230, 63
        %s232 = scalar_select %p231, %s230, 63
        %s233 = scalar_lea.vmem [#allocation5], %s232
        %v234 = vld [vmem:[%s233] sm:$0x1]
        %235 = vst [vmem:[#allocation2 + $0x2] sm:$0x1] %v234
        %s236 = sadd.s32 %s209, 3
        %s237 = sld [smem:[#allocation4 + %s236]]
        %p238 = scmp.gt.s32.totalorder %s237, 0
        %s239 = scalar_select %p238, %s237, 0
        %p240 = scmp.lt.s32.totalorder %s239, 63
        %s241 = scalar_select %p240, %s239, 63
        %s242 = scalar_lea.vmem [#allocation5], %s241
        %v243 = vld [vmem:[%s242] sm:$0x1]
        %244 = vst [vmem:[#allocation2 + $0x3] sm:$0x1] %v243
        %s245 = sadd.s32 %s209, 4
        %s246 = sld [smem:[#allocation4 + %s245]]
        %p247 = scmp.gt.s32.totalorder %s246, 0
        %s248 = scalar_select %p247, %s246, 0
        %p249 = scmp.lt.s32.totalorder %s248, 63
        %s250 = scalar_select %p249, %s248, 63
        %s251 = scalar_lea.vmem [#allocation5], %s250
        %v252 = vld [vmem:[%s251] sm:$0x1]
        %253 = vst [vmem:[#allocation2 + $0x4] sm:$0x1] %v252
        %s254 = sadd.s32 %s209, 5
        %s255 = sld [smem:[#allocation4 + %s254]]
        %p256 = scmp.gt.s32.totalorder %s255, 0
        %s257 = scalar_select %p256, %s255, 0
        %p258 = scmp.lt.s32.totalorder %s257, 63
        %s259 = scalar_select %p258, %s257, 63
        %s260 = scalar_lea.vmem [#allocation5], %s259
        %v261 = vld [vmem:[%s260] sm:$0x1]
        %262 = vst [vmem:[#allocation2 + $0x5] sm:$0x1] %v261
        %s263 = sadd.s32 %s209, 6
        %s264 = sld [smem:[#allocation4 + %s263]]
        %p265 = scmp.gt.s32.totalorder %s264, 0
        %s266 = scalar_select %p265, %s264, 0
        %p267 = scmp.lt.s32.totalorder %s266, 63
        %s268 = scalar_select %p267, %s266, 63
        %s269 = scalar_lea.vmem [#allocation5], %s268
        %v270 = vld [vmem:[%s269] sm:$0x1]
        %271 = vst [vmem:[#allocation2 + $0x6] sm:$0x1] %v270
        %s272 = sadd.s32 %s209, 7
        %s273 = sld [smem:[#allocation4 + %s272]]
        %p274 = scmp.gt.s32.totalorder %s273, 0
        %s275 = scalar_select %p274, %s273, 0
        %p276 = scmp.lt.s32.totalorder %s275, 63
        %s277 = scalar_select %p276, %s275, 63
        %s278 = scalar_lea.vmem [#allocation5], %s277
        %v279 = vld [vmem:[%s278] sm:$0x1]
        %280 = vst [vmem:[#allocation2 + $0x7] sm:$0x1] %v279
        %v281 = vld [vmem:[#allocation2] sm:$0xff]
        %v282 = vld [vmem:[#allocation8] sm:$0xff]
        %v283 = vadd.f32 %v281, %v282
        %284 = vadd.xlane.f32.xlu0 %v283
        %v285 = vpop.xlane.xlu0 %284
        %v286 = vrcp.pop 128.0
        %v287 = vmul.f32 %v285, %v286
        %v288 = vsub.f32 %v283, %v287
        %v289 = vmul.f32 %v288, %v288
        %290 = vadd.xlane.f32.xlu0 %v289
        %v291 = vpop.xlane.xlu0 %290
        %v292 = vmul.f32 %v291, %v286
        %v293 = vadd.f32 %v292, 1e-12
        %v294 = vrsqrt.pop %v293
        %v295 = vmul.f32 %v288, %v294
        %v296 = vld [vmem:[%s3] sm:$0x1]
        %v298 = vlaneseq
        %v299 = vshrl.u32 %v298, 7
        %v300 = vsub.s32 0, %v299
        %v301 = vrot.slane %v296, %v300
        %v303 = vmul.f32 %v295, %v301
        %v304 = vld [vmem:[%s4] sm:$0x1]
        %v306 = vlaneseq
        %v307 = vshrl.u32 %v306, 7
        %v308 = vsub.s32 0, %v307
        %v309 = vrot.slane %v304, %v308
        %v311 = vadd.f32 %v303, %v309
        %312 = vst [vmem:[%s208] sm:$0xff] %v311
        %s313 = sand.u32 %s117, 1
        %s314 = scalar_lea.sflag [#allocation7], %s313
        %s315 = sand.u32 %s117, 1
        %s316 = smul.addr %s315, 8
        %s317 = scalar_lea.vmem [#allocation10], %s316
        // Predicated region
        $region45: #{tpu_custom_call.1} parent=35 // pred_check
          %p318 = pneg %p127
        $region46: #{tpu_custom_call.1} parent=35 // pred_check_branch
          %320 = sbr.rel (%p318) target = $region48
        $region47: #{tpu_custom_call.1} parent=35 // pred_region
          %s322 = ssub.s32 128, 128
          %323 = vsyncadd %s314, %s322
          %s324 = smul.addr %s25, 128
          %s325 = scalar_lea.hbm %s5, %s324
          %s327 = sshll.u32 %s317, 4
          %s328 = int_to_ptr.vmem [resolvable:$true] %s327
          %330 = dma.vmem_to_hbm [thread:$0]  %s328, 128, %s325, %s314
        $region48: #{tpu_custom_call.1} parent=35 // pred_fallthru
          _
      $region36: #{tpu_custom_call.1} parent=5 // pred_fallthru
        _
      %p331 = scmp.le.s32.totalorder 2, %s20
      // Predicated region
      $region49: #{tpu_custom_call.1} parent=5 // pred_check
        %p332 = pneg %p331
      $region50: #{tpu_custom_call.1} parent=5 // pred_check_branch
        %334 = sbr.rel (%p332) target = $region52
      $region51: #{tpu_custom_call.1} parent=5 // pred_region
        %s335 = ssub.s32 %s20, 2
        // Predicated region
        $region53: #{tpu_custom_call.1} parent=51 // pred_check
          %p336 = pneg %p133
        $region54: #{tpu_custom_call.1} parent=51 // pred_check_branch
          %338 = sbr.rel (%p336) target = $region56
        $region55: #{tpu_custom_call.1} parent=51 // pred_region
          %s339 = sand.u32 %s118, 1
          %s340 = scalar_lea.sflag [#allocation7], %s339
          %s341 = sand.u32 %s118, 1
          %s342 = smul.addr %s341, 8
          %s343 = scalar_lea.vmem [#allocation10], %s342
          %344 = dma.done %s340, 128
        $region56: #{tpu_custom_call.1} parent=51 // pred_fallthru
          _
      $region52: #{tpu_custom_call.1} parent=5 // pred_fallthru
        _
    $region6: #{tpu_custom_call.1} parent=1 // loop_footer
      %s24 = sadd.s32 1, %s20
    $region7: #{tpu_custom_call.1} parent=1 // loop_footer_branch
      %19 = sbr.rel target = $region3
    $region8: #{tpu_custom_call.1} parent=1 // loop_exit
      _
    %345 = vsyncpa [#allocation6], 1
    %s346 = scalar_lea.sflag [#allocation6], 1
    %347 = vsyncpa %s346, 1
    %348 = vsyncpa [#allocation9], 1
    %349 = vsyncpa [#allocation7], 1
    %s350 = scalar_lea.sflag [#allocation7], 1
    %351 = vsyncpa %s350, 1

</llo_original>
